<compile_context>
chip_gen: v5e
topology: v5e:2x2
jax: 0.10.0
libtpu: 0.0.40
codegen_flags: <defaults>
</compile_context>

<pallas_src>
import functools

import jax
import jax.numpy as jnp
from jax import lax
from jax.experimental import pallas as pl
from jax.experimental.pallas import tpu as pltpu


def _round_up(x, m):
    return (x + m - 1) // m * m


def _pad2(a, rows, cols):
    pr, pc = rows - a.shape[0], cols - a.shape[1]
    if pr or pc:
        a = jnp.pad(a, ((0, pr), (0, pc)))
    return a


def _device_kind():
    try:
        return jax.devices()[0].device_kind.lower()
    except Exception:
        return ""


def _preferred_tile_m():
    # v6e/v7x MXU is 2x256^2: a 256-row LHS tile doubles M-occupancy and halves
    # grid steps. v5e (and older) MXUs are 128-wide, so 128 is native and a
    # 256-row tile only doubles x-DMA / VMEM pressure.
    kind = _device_kind()
    return 256 if ("v6" in kind or "v7" in kind) else 128


def _num_tensorcores():
    # v7x has 2 TensorCores per chip sharing the ("parallel",) grid axis.
    return 2 if "v7" in _device_kind() else 1


def _choose_tile_m(n, preferred, num_tc):
    n8 = _round_up(max(n, 1), 8)
    tile = min(preferred, n8)
    if num_tc > 1 and n8 >= 2 * 8:
        # Ensure grid_m >= num_tc so every TensorCore gets at least one tile.
        per_core = _round_up(pl.cdiv(n8, num_tc), 8)
        tile = min(tile, per_core)
    return max(tile, 8)


def _fewshot_kernel(relu, dot_dtype, x_ref, wb_ref, bb_ref, wc_ref, bc_ref, o_ref):
    # x_ref:  [TM, Din_p]    f32 (cast to bf16 here, on-chip)
    # wb_ref: [Din_p, Df_p]  bf16, grid-invariant, single-buffered VMEM-resident
    # bb_ref: [1, Df_p]      f32
    # wc_ref: [Df_p, C_p]    bf16, pre-transposed once at init (plain NN matmul)
    # bc_ref: [1, C_p]       f32
    # o_ref:  [TM, C_p]      f32, lane-dense store

    x = x_ref[...].astype(dot_dtype)                      # VPU cast, free under MXU
    feat = jnp.dot(x, wb_ref[...], preferred_element_type=jnp.float32)
    feat = feat + bb_ref[...]

    if relu:
        feat = jnp.maximum(feat, 0.0)

    # F.normalize(dim=1, eps=1e-12): x * rsqrt(max(||x||^2, eps^2)).
    # rsqrt lowers to the EUP slot; the divide is replaced by a multiply.
    sumsq = jnp.sum(feat * feat, axis=-1, keepdims=True)
    feat = feat * lax.rsqrt(jnp.maximum(sumsq, 1e-24))

    # Classifier Linear: NN matmul against the pre-transposed weight.
    out = jnp.dot(feat.astype(dot_dtype), wc_ref[...],
                  preferred_element_type=jnp.float32)
    o_ref[...] = out + bc_ref[...]


class FewShotHead:
    """FewShotModel forward. Weight pad/cast/transpose is paid ONCE at init."""

    def __init__(self, wb, bb, wc, bc, *, relu=True, dot_dtype=jnp.bfloat16):
        # wb: [Din, Dfeat]; bb: [Dfeat]; wc: [C, Dfeat] (PyTorch Linear layout); bc: [C]
        self.relu = bool(relu)
        self.dot_dtype = dot_dtype
        self.din, self.dfeat = int(wb.shape[0]), int(wb.shape[1])
        self.num_classes = int(wc.shape[0])

        din_p = _round_up(self.din, 128)
        dfeat_p = _round_up(self.dfeat, 128)
        c_p = _round_up(self.num_classes, 128)
        self._din_p, self._dfeat_p, self._c_p = din_p, dfeat_p, c_p

        # Cached padded/cast weights (all padding is exact zeros -> same math).
        self.wb = _pad2(wb, din_p, dfeat_p).astype(dot_dtype)
        self.wc_t = jnp.transpose(_pad2(wc, c_p, dfeat_p).astype(dot_dtype))  # [Df_p, C_p]
        self.bb = _pad2(jnp.reshape(bb, (1, self.dfeat)), 1, dfeat_p).astype(jnp.float32)
        self.bc = _pad2(jnp.reshape(bc, (1, self.num_classes)), 1, c_p).astype(jnp.float32)

    def __call__(self, x, *, tile_m=None):
        n = x.shape[0]
        x_flat = jnp.reshape(x, (n, -1)).astype(jnp.float32)   # torch .view(N, -1)
        assert x_flat.shape[1] == self.din

        if tile_m is None:
            tile_m = _preferred_tile_m()
        tile_m = _choose_tile_m(n, tile_m, _num_tensorcores())
        n_p = _round_up(n, tile_m)
        grid_m = n_p // tile_m

        x_p = _pad2(x_flat, n_p, self._din_p)   # stays f32; kernel casts on-chip

        def _resident(shape):
            # Grid-invariant operand: constant index_map keeps it VMEM-resident
            # across grid steps; Buffered(1) drops the default double-buffering
            # (halves the VMEM held by weights/biases).
            return pl.BlockSpec(shape, lambda i: (0, 0),
                                pipeline_mode=pl.Buffered(1))

        out_full = pl.pallas_call(
            functools.partial(_fewshot_kernel, self.relu, self.dot_dtype),
            out_shape=jax.ShapeDtypeStruct((n_p, self._c_p), jnp.float32),
            grid=(grid_m,),
            in_specs=[
                pl.BlockSpec((tile_m, self._din_p), lambda i: (i, 0)),  # x tile
                _resident((self._din_p, self._dfeat_p)),                # Wb
                _resident((1, self._dfeat_p)),                          # bb
                _resident((self._dfeat_p, self._c_p)),                  # Wc^T
                _resident((1, self._c_p)),                              # bc
            ],
            out_specs=pl.BlockSpec((tile_m, self._c_p), lambda i: (i, 0)),
            compiler_params=pltpu.CompilerParams(
                dimension_semantics=("parallel",)),
        )(x_p, self.wb, self.bb, self.wc_t, self.bc)

        # TODO(synk): for large query batches emit the padded output in bf16
        # (or un-pad C) to cut writeback bytes; kept f32 here for exactness.
        return out_full[:n, :self.num_classes]


# ---------------------------------------------------------------------------
# Plain-JAX helpers (one-time __init__ glue + reference checks).
# ---------------------------------------------------------------------------

def backbone_ref(x_flat, wb, bb, relu):
    feat = x_flat @ wb + bb
    if relu:
        feat = jnp.maximum(feat, 0.0)
    return feat


def support_based_classifier(feat, y, num_classes):
    """Per-class l2-normalized mean of features (get_classifier)."""
    onehot = (y[:, None] == jnp.arange(num_classes)[None, :]).astype(jnp.float32)
    counts = onehot.sum(axis=0)
    sums = onehot.T @ feat
    means = sums / jnp.maximum(counts[:, None], 1.0)
    norms = jnp.sqrt(jnp.sum(means * means, axis=1, keepdims=True))
    return means / jnp.maximum(norms, 1e-12)


def forward_matched_ref(x_flat, wb, bb, wc, bc, relu, dot_dtype):
    """Reference mirroring the kernel's numerics (bf16 dots, f32 acc, rsqrt)."""
    feat = jnp.dot(x_flat.astype(dot_dtype), wb.astype(dot_dtype),
                   preferred_element_type=jnp.float32) + bb
    if relu:
        feat = jnp.maximum(feat, 0.0)
    inv = lax.rsqrt(jnp.maximum(jnp.sum(feat * feat, -1, keepdims=True), 1e-24))
    feat = feat * inv
    out = jnp.dot(feat.astype(dot_dtype), jnp.transpose(wc.astype(dot_dtype)),
                  preferred_element_type=jnp.float32)
    return out + bc


def forward_f32_ref(x_flat, wb, bb, wc, bc, relu):
    """Pure-f32 module semantics (torch forward)."""
    feat = backbone_ref(x_flat, wb, bb, relu)
    feat = feat / jnp.maximum(
        jnp.sqrt(jnp.sum(feat * feat, axis=1, keepdims=True)), 1e-12)
    return feat @ wc.T + bc


if __name__ == "__main__":
    key = jax.random.PRNGKey(0)
    kx, ks, kwb, kbb = jax.random.split(key, 4)

    # Small shapes consistent with the module.
    N, C_in, H, W = 2, 4, 16, 16           # query batch (NCHW)
    D_in = C_in * H * W                     # flattened input dim = 1024
    D_feat = 64                             # backbone output ("logits") dim
    NUM_CLASSES = 8
    N_SUPPORT = 16
    RELU = True

    # Deterministic backbone params (synthetic "pre-trained" linear backbone).
    wb = (jax.random.normal(kwb, (D_in, D_feat), dtype=jnp.float32)
          / jnp.sqrt(jnp.float32(D_in)))
    bb = jax.random.normal(kbb, (D_feat,), dtype=jnp.float32) * 0.01

    # Support set -> support-based classifier init (mirrors __init__), f32 glue.
    x_support = jax.random.normal(ks, (N_SUPPORT, C_in, H, W), dtype=jnp.float32)
    y_support = jnp.arange(N_SUPPORT, dtype=jnp.int32) % NUM_CLASSES
    feat_support = backbone_ref(x_support.reshape(N_SUPPORT, D_in), wb, bb, RELU)
    wc = support_based_classifier(feat_support, y_support, NUM_CLASSES)  # [C, Dfeat]
    bc = jnp.zeros((NUM_CLASSES,), dtype=jnp.float32)                    # bias.zero_()

    # One-time weight prep (pad/cast/transpose cached on the head), then a
    # jitted forward whose weights are baked-in constants: no per-call prep.
    head = FewShotHead(wb, bb, wc, bc, relu=RELU)
    forward = jax.jit(head.__call__)

    # Query input (NCHW); the head flattens exactly like torch .view(N, -1).
    x = jax.random.normal(kx, (N, C_in, H, W), dtype=jnp.float32)
    out = jax.block_until_ready(forward(x))
    assert out.shape == (N, NUM_CLASSES)

    x_flat = x.reshape(N, D_in)

    # Tight check against a reference with matching numerics (bf16 dots).
    ref_matched = forward_matched_ref(x_flat, wb, bb, wc, bc, RELU, jnp.bfloat16)
    assert jnp.allclose(out, ref_matched, atol=1e-3, rtol=1e-3), (
        jnp.max(jnp.abs(out - ref_matched)))

    # Loose check against pure-f32 module semantics (bf16 MXU inputs).
    ref_f32 = forward_f32_ref(x_flat, wb, bb, wc, bc, RELU)
    assert jnp.allclose(out, ref_f32, atol=3e-2, rtol=3e-2), (
        jnp.max(jnp.abs(out - ref_f32)))

    print("KERNEL_OK")
</pallas_src>

<mosaic_0001>
module attributes {stable_mosaic.version = 11 : i64} {
  func.func @_fewshot_kernel(%arg0: i32, %arg1: memref<8x1024xf32, #tpu.memory_space<vmem>>, %arg2: memref<1024x128xbf16, #tpu.memory_space<vmem>>, %arg3: memref<1x128xf32, #tpu.memory_space<vmem>>, %arg4: memref<128x128xbf16, #tpu.memory_space<vmem>>, %arg5: memref<1x128xf32, #tpu.memory_space<vmem>>, %arg6: memref<8x128xf32, #tpu.memory_space<vmem>>) attributes {dimension_semantics = [#tpu.dimension_semantics<parallel>], iteration_bounds = array<i64: 1>, scalar_prefetch = 0 : i64, scratch_operands = 0 : i64, tpu.core_type = #tpu.core_type<tc>, window_params = [{transform_indices = @transform_0, window_bounds = array<i64: 8, 1024>}, {pipeline_mode = #tpu.pipeline_mode<synchronous>, transform_indices = @transform_1, window_bounds = array<i64: 1024, 128>}, {pipeline_mode = #tpu.pipeline_mode<synchronous>, transform_indices = @transform_2, window_bounds = array<i64: 1, 128>}, {pipeline_mode = #tpu.pipeline_mode<synchronous>, transform_indices = @transform_3, window_bounds = array<i64: 128, 128>}, {pipeline_mode = #tpu.pipeline_mode<synchronous>, transform_indices = @transform_4, window_bounds = array<i64: 1, 128>}, {transform_indices = @transform_5, window_bounds = array<i64: 8, 128>}]} {
    %c0 = arith.constant 0 : index
    %c0_0 = arith.constant 0 : index
    %0 = vector.load %arg1[%c0, %c0_0] : memref<8x1024xf32, #tpu.memory_space<vmem>>, vector<8x1024xf32>
    %1 = arith.truncf %0 : vector<8x1024xf32> to vector<8x1024xbf16>
    %c0_1 = arith.constant 0 : index
    %c0_2 = arith.constant 0 : index
    %2 = vector.load %arg2[%c0_1, %c0_2] : memref<1024x128xbf16, #tpu.memory_space<vmem>>, vector<1024x128xbf16>
    %cst = arith.constant dense<0.000000e+00> : vector<8x128xf32>
    %3 = tpu.matmul %1, %2, %cst {dimension_numbers = #tpu.dot_dimension_numbers<[1], [0], [0], [1], [0, 0, 1, 1], [], []>} : vector<8x1024xbf16>, vector<1024x128xbf16>, vector<8x128xf32> -> vector<8x128xf32>
    %c0_3 = arith.constant 0 : index
    %c0_4 = arith.constant 0 : index
    %4 = vector.load %arg3[%c0_3, %c0_4] : memref<1x128xf32, #tpu.memory_space<vmem>>, vector<1x128xf32>
    %5 = vector.broadcast %4 : vector<1x128xf32> to vector<8x128xf32>
    %6 = arith.addf %3, %5 : vector<8x128xf32>
    %cst_5 = arith.constant 0.000000e+00 : f32
    %7 = vector.broadcast %cst_5 : f32 to vector<8x128xf32>
    %8 = arith.maximumf %6, %7 : vector<8x128xf32>
    %9 = arith.mulf %8, %8 : vector<8x128xf32>
    %cst_6 = arith.constant dense<0.000000e+00> : vector<8xf32>
    %10 = vector.multi_reduction <add>, %9, %cst_6 [1] : vector<8x128xf32> to vector<8xf32>
    %11 = vector.shape_cast %10 : vector<8xf32> to vector<8x1xf32>
    %cst_7 = arith.constant 1.000000e-24 : f32
    %12 = vector.broadcast %cst_7 : f32 to vector<8x1xf32>
    %13 = arith.maximumf %11, %12 : vector<8x1xf32>
    %14 = math.rsqrt %13 : vector<8x1xf32>
    %15 = vector.broadcast %14 : vector<8x1xf32> to vector<8x128xf32>
    %16 = arith.mulf %8, %15 : vector<8x128xf32>
    %17 = arith.truncf %16 : vector<8x128xf32> to vector<8x128xbf16>
    %c0_8 = arith.constant 0 : index
    %c0_9 = arith.constant 0 : index
    %18 = vector.load %arg4[%c0_8, %c0_9] : memref<128x128xbf16, #tpu.memory_space<vmem>>, vector<128x128xbf16>
    %cst_10 = arith.constant dense<0.000000e+00> : vector<8x128xf32>
    %19 = tpu.matmul %17, %18, %cst_10 {dimension_numbers = #tpu.dot_dimension_numbers<[1], [0], [0], [1], [0, 0, 1, 1], [], []>} : vector<8x128xbf16>, vector<128x128xbf16>, vector<8x128xf32> -> vector<8x128xf32>
    %c0_11 = arith.constant 0 : index
    %c0_12 = arith.constant 0 : index
    %20 = vector.load %arg5[%c0_11, %c0_12] : memref<1x128xf32, #tpu.memory_space<vmem>>, vector<1x128xf32>
    %21 = vector.broadcast %20 : vector<1x128xf32> to vector<8x128xf32>
    %22 = arith.addf %19, %21 : vector<8x128xf32>
    %c0_13 = arith.constant 0 : index
    %c0_14 = arith.constant 0 : index
    %23 = vector.load %arg6[%c0_13, %c0_14] : memref<8x128xf32, #tpu.memory_space<vmem>>, vector<8x128xf32>
    tpu.vector_store %arg6[%c0_13, %c0_14], %22 {strides = array<i32>} : memref<8x128xf32, #tpu.memory_space<vmem>>, vector<8x128xf32>,
    return
  }
  func.func @transform_0(%arg0: i32) -> (i32, i32) {
    %c0_i32 = arith.constant 0 : i32
    %c0_i32_0 = arith.constant 0 : i32
    return %arg0, %c0_i32 : i32, i32
  }
  func.func @transform_1(%arg0: i32) -> (i32, i32) {
    %c0_i32 = arith.constant 0 : i32
    %c0_i32_0 = arith.constant 0 : i32
    %c0_i32_1 = arith.constant 0 : i32
    return %c0_i32, %c0_i32_0 : i32, i32
  }
  func.func @transform_2(%arg0: i32) -> (i32, i32) {
    %c0_i32 = arith.constant 0 : i32
    %c0_i32_0 = arith.constant 0 : i32
    %c0_i32_1 = arith.constant 0 : i32
    return %c0_i32, %c0_i32_0 : i32, i32
  }
  func.func @transform_3(%arg0: i32) -> (i32, i32) {
    %c0_i32 = arith.constant 0 : i32
    %c0_i32_0 = arith.constant 0 : i32
    %c0_i32_1 = arith.constant 0 : i32
    return %c0_i32, %c0_i32_0 : i32, i32
  }
  func.func @transform_4(%arg0: i32) -> (i32, i32) {
    %c0_i32 = arith.constant 0 : i32
    %c0_i32_0 = arith.constant 0 : i32
    %c0_i32_1 = arith.constant 0 : i32
    return %c0_i32, %c0_i32_0 : i32, i32
  }
  func.func @transform_5(%arg0: i32) -> (i32, i32) {
    %c0_i32 = arith.constant 0 : i32
    %c0_i32_0 = arith.constant 0 : i32
    return %arg0, %c0_i32 : i32, i32
  }
}

</mosaic_0001>

<llo_original>
// kernel: a_call__.1
$region0: #{a_call__.1}
  #allocation0 [shape = 'u32[]', space=smem, size = 0x4, offset = 0x4, fixed_abs, tag = 'smem constant byte address 0x4 - core index']
  #allocation1 [shape = 'u32[72,128]{1,0:T(1,128)}', space=vmem, size = 0x9000, scoped, tag = 'internal scratch']
  %s0 = inlined_call_operand.vmem [shape: f32[8,1024], index: 0, kind: input, shape index: {}]
  %s1 = inlined_call_operand.hbm [shape: bf16[1024,128], index: 1, kind: input, shape index: {}]
  %s2 = inlined_call_operand.vmem [shape: f32[1,128], index: 2, kind: input, shape index: {}]
  %s3 = inlined_call_operand.vmem [shape: bf16[128,128], index: 3, kind: input, shape index: {}]
  %s4 = inlined_call_operand.vmem [shape: f32[1,128], index: 4, kind: input, shape index: {}]
  %s5 = inlined_call_operand.vmem [shape: f32[8,128], index: 5, kind: output, shape index: {}]
  %s6 = sld [smem:[#allocation0]]
  $region34: #{a_call__.1} parent=0
    _
  %s8 = ssub.s32 1, %s6
  %s9 = scalar_select 0, %s8, %s6
  $region1: #{a_call__.1} parent=0
    #allocation2 [shape = 'u8[262144]{0}', space=vmem, size = 0x40000, scoped, tag = 'input window, operand 1, single buffered']
    #allocation3 [shape = 's32[1]{0}', space=sflag, size = 0x4, scoped, tag = 'scoped memory for a_call__.1']
    %10 = vsyncpa [#allocation3], 0
    // Predicated region
    $region2: #{a_call__.1} parent=1 // pred_check
      _
    $region3: #{a_call__.1} parent=1 // pred_check_branch
      %12 = sbr.rel (0) target = $region5
    $region4: #{a_call__.1} parent=1 // pred_region
      _
    $region5: #{a_call__.1} parent=1 // pred_fallthru
      _
    // Predicated region
    $region6: #{a_call__.1} parent=1 // pred_check
      _
    $region7: #{a_call__.1} parent=1 // pred_check_branch
      %14 = sbr.rel (0) target = $region9
    $region8: #{a_call__.1} parent=1 // pred_region
      %16 = vsyncadd [#allocation3], 0
      %s17 = sshll.u32 %s1, 4
      %s18 = int_to_ptr.hbm [resolvable:$true] %s17
      %s19 = sshll.u32 [#allocation2], 4
      %s20 = int_to_ptr.vmem [resolvable:$true] %s19
      %25 = dma.hbm_to_vmem [thread:$0]  %s18, 8192, %s20, [#allocation3], 64, 64, 4
    $region9: #{a_call__.1} parent=1 // pred_fallthru
      _
    // Predicated region
    $region10: #{a_call__.1} parent=1 // pred_check
      _
    $region11: #{a_call__.1} parent=1 // pred_check_branch
      %27 = sbr.rel (0) target = $region13
    $region12: #{a_call__.1} parent=1 // pred_region
      _
    $region13: #{a_call__.1} parent=1 // pred_fallthru
      _
    // Predicated region
    $region14: #{a_call__.1} parent=1 // pred_check
      _
    $region15: #{a_call__.1} parent=1 // pred_check_branch
      %29 = sbr.rel (0) target = $region17
    $region16: #{a_call__.1} parent=1 // pred_region
      _
    $region17: #{a_call__.1} parent=1 // pred_fallthru
      _
    // Predicated region
    $region18: #{a_call__.1} parent=1 // pred_check
      _
    $region19: #{a_call__.1} parent=1 // pred_check_branch
      %31 = sbr.rel (0) target = $region21
    $region20: #{a_call__.1} parent=1 // pred_region
      _
    $region21: #{a_call__.1} parent=1 // pred_fallthru
      _
    // Predicated region
    $region22: #{a_call__.1} parent=1 // pred_check
      _
    $region23: #{a_call__.1} parent=1 // pred_check_branch
      %33 = sbr.rel (0) target = $region25
    $region24: #{a_call__.1} parent=1 // pred_region
      %35 = dma.done [#allocation3], 8192
    $region25: #{a_call__.1} parent=1 // pred_fallthru
      _
    %v36 = vld [vmem:[%s0] sm:$0xff]
    %v37 = vld [vmem:[%s0 + $0x8] sm:$0xff]
    %v38 = vld [vmem:[%s0 + $0x10] sm:$0xff]
    %v39 = vld [vmem:[%s0 + $0x18] sm:$0xff]
    %v40 = vld [vmem:[%s0 + $0x20] sm:$0xff]
    %v41 = vld [vmem:[%s0 + $0x28] sm:$0xff]
    %v42 = vld [vmem:[%s0 + $0x30] sm:$0xff]
    %v43 = vld [vmem:[%s0 + $0x38] sm:$0xff]
    %v44 = vpack.c.bf16 %v36, %v36
    %v45 = vpack.c.bf16 %v37, %v37
    %v46 = vpack.c.bf16 %v38, %v38
    %v47 = vpack.c.bf16 %v39, %v39
    %v48 = vpack.c.bf16 %v40, %v40
    %v49 = vpack.c.bf16 %v41, %v41
    %v50 = vpack.c.bf16 %v42, %v42
    %v51 = vpack.c.bf16 %v43, %v43
    %v52 = vld [vmem:[#allocation2] sm:$0xf]
    %v53 = vld [vmem:[#allocation2 + $0x4] sm:$0xf]
    %v54 = vld [vmem:[#allocation2 + $0x8] sm:$0xf]
    %v55 = vld [vmem:[#allocation2 + $0xc] sm:$0xf]
    %v56 = vld [vmem:[#allocation2 + $0x10] sm:$0xf]
    %v57 = vld [vmem:[#allocation2 + $0x14] sm:$0xf]
    %v58 = vld [vmem:[#allocation2 + $0x18] sm:$0xf]
    %v59 = vld [vmem:[#allocation2 + $0x1c] sm:$0xf]
    %v60 = vld [vmem:[#allocation2 + $0x20] sm:$0xf]
    %v61 = vld [vmem:[#allocation2 + $0x24] sm:$0xf]
    %v62 = vld [vmem:[#allocation2 + $0x28] sm:$0xf]
    %v63 = vld [vmem:[#allocation2 + $0x2c] sm:$0xf]
    %v64 = vld [vmem:[#allocation2 + $0x30] sm:$0xf]
    %v65 = vld [vmem:[#allocation2 + $0x34] sm:$0xf]
    %v66 = vld [vmem:[#allocation2 + $0x38] sm:$0xf]
    %v67 = vld [vmem:[#allocation2 + $0x3c] sm:$0xf]
    %v68 = vld [vmem:[#allocation2 + $0x40] sm:$0xf]
    %v69 = vld [vmem:[#allocation2 + $0x44] sm:$0xf]
    %v70 = vld [vmem:[#allocation2 + $0x48] sm:$0xf]
    %v71 = vld [vmem:[#allocation2 + $0x4c] sm:$0xf]
    %v72 = vld [vmem:[#allocation2 + $0x50] sm:$0xf]
    %v73 = vld [vmem:[#allocation2 + $0x54] sm:$0xf]
    %v74 = vld [vmem:[#allocation2 + $0x58] sm:$0xf]
    %v75 = vld [vmem:[#allocation2 + $0x5c] sm:$0xf]
    %v76 = vld [vmem:[#allocation2 + $0x60] sm:$0xf]
    %v77 = vld [vmem:[#allocation2 + $0x64] sm:$0xf]
    %v78 = vld [vmem:[#allocation2 + $0x68] sm:$0xf]
    %v79 = vld [vmem:[#allocation2 + $0x6c] sm:$0xf]
    %v80 = vld [vmem:[#allocation2 + $0x70] sm:$0xf]
    %v81 = vld [vmem:[#allocation2 + $0x74] sm:$0xf]
    %v82 = vld [vmem:[#allocation2 + $0x78] sm:$0xf]
    %v83 = vld [vmem:[#allocation2 + $0x7c] sm:$0xf]
    %v84 = vld [vmem:[#allocation2 + $0x80] sm:$0xf]
    %v85 = vld [vmem:[#allocation2 + $0x84] sm:$0xf]
    %v86 = vld [vmem:[#allocation2 + $0x88] sm:$0xf]
    %v87 = vld [vmem:[#allocation2 + $0x8c] sm:$0xf]
    %v88 = vld [vmem:[#allocation2 + $0x90] sm:$0xf]
    %v89 = vld [vmem:[#allocation2 + $0x94] sm:$0xf]
    %v90 = vld [vmem:[#allocation2 + $0x98] sm:$0xf]
    %v91 = vld [vmem:[#allocation2 + $0x9c] sm:$0xf]
    %v92 = vld [vmem:[#allocation2 + $0xa0] sm:$0xf]
    %v93 = vld [vmem:[#allocation2 + $0xa4] sm:$0xf]
    %v94 = vld [vmem:[#allocation2 + $0xa8] sm:$0xf]
    %v95 = vld [vmem:[#allocation2 + $0xac] sm:$0xf]
    %v96 = vld [vmem:[#allocation2 + $0xb0] sm:$0xf]
    %v97 = vld [vmem:[#allocation2 + $0xb4] sm:$0xf]
    %v98 = vld [vmem:[#allocation2 + $0xb8] sm:$0xf]
    %v99 = vld [vmem:[#allocation2 + $0xbc] sm:$0xf]
    %v100 = vld [vmem:[#allocation2 + $0xc0] sm:$0xf]
    %v101 = vld [vmem:[#allocation2 + $0xc4] sm:$0xf]
    %v102 = vld [vmem:[#allocation2 + $0xc8] sm:$0xf]
    %v103 = vld [vmem:[#allocation2 + $0xcc] sm:$0xf]
    %v104 = vld [vmem:[#allocation2 + $0xd0] sm:$0xf]
    %v105 = vld [vmem:[#allocation2 + $0xd4] sm:$0xf]
    %v106 = vld [vmem:[#allocation2 + $0xd8] sm:$0xf]
    %v107 = vld [vmem:[#allocation2 + $0xdc] sm:$0xf]
    %v108 = vld [vmem:[#allocation2 + $0xe0] sm:$0xf]
    %v109 = vld [vmem:[#allocation2 + $0xe4] sm:$0xf]
    %v110 = vld [vmem:[#allocation2 + $0xe8] sm:$0xf]
    %v111 = vld [vmem:[#allocation2 + $0xec] sm:$0xf]
    %v112 = vld [vmem:[#allocation2 + $0xf0] sm:$0xf]
    %v113 = vld [vmem:[#allocation2 + $0xf4] sm:$0xf]
    %v114 = vld [vmem:[#allocation2 + $0xf8] sm:$0xf]
    %v115 = vld [vmem:[#allocation2 + $0xfc] sm:$0xf]
    %v116 = vld [vmem:[#allocation2 + $0x100] sm:$0xf]
    %v117 = vld [vmem:[#allocation2 + $0x104] sm:$0xf]
    %v118 = vld [vmem:[#allocation2 + $0x108] sm:$0xf]
    %v119 = vld [vmem:[#allocation2 + $0x10c] sm:$0xf]
    %v120 = vld [vmem:[#allocation2 + $0x110] sm:$0xf]
    %v121 = vld [vmem:[#allocation2 + $0x114] sm:$0xf]
    %v122 = vld [vmem:[#allocation2 + $0x118] sm:$0xf]
    %v123 = vld [vmem:[#allocation2 + $0x11c] sm:$0xf]
    %v124 = vld [vmem:[#allocation2 + $0x120] sm:$0xf]
    %v125 = vld [vmem:[#allocation2 + $0x124] sm:$0xf]
    %v126 = vld [vmem:[#allocation2 + $0x128] sm:$0xf]
    %v127 = vld [vmem:[#allocation2 + $0x12c] sm:$0xf]
    %v128 = vld [vmem:[#allocation2 + $0x130] sm:$0xf]
    %v129 = vld [vmem:[#allocation2 + $0x134] sm:$0xf]
    %v130 = vld [vmem:[#allocation2 + $0x138] sm:$0xf]
    %v131 = vld [vmem:[#allocation2 + $0x13c] sm:$0xf]
    %v132 = vld [vmem:[#allocation2 + $0x140] sm:$0xf]
    %v133 = vld [vmem:[#allocation2 + $0x144] sm:$0xf]
    %v134 = vld [vmem:[#allocation2 + $0x148] sm:$0xf]
    %v135 = vld [vmem:[#allocation2 + $0x14c] sm:$0xf]
    %v136 = vld [vmem:[#allocation2 + $0x150] sm:$0xf]
    %v137 = vld [vmem:[#allocation2 + $0x154] sm:$0xf]
    %v138 = vld [vmem:[#allocation2 + $0x158] sm:$0xf]
    %v139 = vld [vmem:[#allocation2 + $0x15c] sm:$0xf]
    %v140 = vld [vmem:[#allocation2 + $0x160] sm:$0xf]
    %v141 = vld [vmem:[#allocation2 + $0x164] sm:$0xf]
    %v142 = vld [vmem:[#allocation2 + $0x168] sm:$0xf]
    %v143 = vld [vmem:[#allocation2 + $0x16c] sm:$0xf]
    %v144 = vld [vmem:[#allocation2 + $0x170] sm:$0xf]
    %v145 = vld [vmem:[#allocation2 + $0x174] sm:$0xf]
    %v146 = vld [vmem:[#allocation2 + $0x178] sm:$0xf]
    %v147 = vld [vmem:[#allocation2 + $0x17c] sm:$0xf]
    %v148 = vld [vmem:[#allocation2 + $0x180] sm:$0xf]
    %v149 = vld [vmem:[#allocation2 + $0x184] sm:$0xf]
    %v150 = vld [vmem:[#allocation2 + $0x188] sm:$0xf]
    %v151 = vld [vmem:[#allocation2 + $0x18c] sm:$0xf]
    %v152 = vld [vmem:[#allocation2 + $0x190] sm:$0xf]
    %v153 = vld [vmem:[#allocation2 + $0x194] sm:$0xf]
    %v154 = vld [vmem:[#allocation2 + $0x198] sm:$0xf]
    %v155 = vld [vmem:[#allocation2 + $0x19c] sm:$0xf]
    %v156 = vld [vmem:[#allocation2 + $0x1a0] sm:$0xf]
    %v157 = vld [vmem:[#allocation2 + $0x1a4] sm:$0xf]
    %v158 = vld [vmem:[#allocation2 + $0x1a8] sm:$0xf]
    %v159 = vld [vmem:[#allocation2 + $0x1ac] sm:$0xf]
    %v160 = vld [vmem:[#allocation2 + $0x1b0] sm:$0xf]
    %v161 = vld [vmem:[#allocation2 + $0x1b4] sm:$0xf]
    %v162 = vld [vmem:[#allocation2 + $0x1b8] sm:$0xf]
    %v163 = vld [vmem:[#allocation2 + $0x1bc] sm:$0xf]
    %v164 = vld [vmem:[#allocation2 + $0x1c0] sm:$0xf]
    %v165 = vld [vmem:[#allocation2 + $0x1c4] sm:$0xf]
    %v166 = vld [vmem:[#allocation2 + $0x1c8] sm:$0xf]
    %v167 = vld [vmem:[#allocation2 + $0x1cc] sm:$0xf]
    %v168 = vld [vmem:[#allocation2 + $0x1d0] sm:$0xf]
    %v169 = vld [vmem:[#allocation2 + $0x1d4] sm:$0xf]
    %v170 = vld [vmem:[#allocation2 + $0x1d8] sm:$0xf]
    %v171 = vld [vmem:[#allocation2 + $0x1dc] sm:$0xf]
    %v172 = vld [vmem:[#allocation2 + $0x1e0] sm:$0xf]
    %v173 = vld [vmem:[#allocation2 + $0x1e4] sm:$0xf]
    %v174 = vld [vmem:[#allocation2 + $0x1e8] sm:$0xf]
    %v175 = vld [vmem:[#allocation2 + $0x1ec] sm:$0xf]
    %v176 = vld [vmem:[#allocation2 + $0x1f0] sm:$0xf]
    %v177 = vld [vmem:[#allocation2 + $0x1f4] sm:$0xf]
    %v178 = vld [vmem:[#allocation2 + $0x1f8] sm:$0xf]
    %v179 = vld [vmem:[#allocation2 + $0x1fc] sm:$0xf]
    %v180 = vld [vmem:[%s2] sm:$0x1]
    %v182 = vperm.slane %v180, 0
    %v312 = vunpack.c.l.b16 %v52
    %v313 = vunpack.c.l.b16 %v53
    %v314 = vunpack.c.l.b16 %v54
    %v315 = vunpack.c.l.b16 %v55
    %v316 = vunpack.c.l.b16 %v56
    %v317 = vunpack.c.l.b16 %v57
    %v318 = vunpack.c.l.b16 %v58
    %v319 = vunpack.c.l.b16 %v59
    %v320 = vunpack.c.l.b16 %v60
    %v321 = vunpack.c.l.b16 %v61
    %v322 = vunpack.c.l.b16 %v62
    %v323 = vunpack.c.l.b16 %v63
    %v324 = vunpack.c.l.b16 %v64
    %v325 = vunpack.c.l.b16 %v65
    %v326 = vunpack.c.l.b16 %v66
    %v327 = vunpack.c.l.b16 %v67
    %v328 = vunpack.c.l.b16 %v68
    %v329 = vunpack.c.l.b16 %v69
    %v330 = vunpack.c.l.b16 %v70
    %v331 = vunpack.c.l.b16 %v71
    %v332 = vunpack.c.l.b16 %v72
    %v333 = vunpack.c.l.b16 %v73
    %v334 = vunpack.c.l.b16 %v74
    %v335 = vunpack.c.l.b16 %v75
    %v336 = vunpack.c.l.b16 %v76
    %v337 = vunpack.c.l.b16 %v77
    %v338 = vunpack.c.l.b16 %v78
    %v339 = vunpack.c.l.b16 %v79
    %v340 = vunpack.c.l.b16 %v80
    %v341 = vunpack.c.l.b16 %v81
    %v342 = vunpack.c.l.b16 %v82
    %v343 = vunpack.c.l.b16 %v83
    %v344 = vunpack.c.l.b16 %v84
    %v345 = vunpack.c.l.b16 %v85
    %v346 = vunpack.c.l.b16 %v86
    %v347 = vunpack.c.l.b16 %v87
    %v348 = vunpack.c.l.b16 %v88
    %v349 = vunpack.c.l.b16 %v89
    %v350 = vunpack.c.l.b16 %v90
    %v351 = vunpack.c.l.b16 %v91
    %v352 = vunpack.c.l.b16 %v92
    %v353 = vunpack.c.l.b16 %v93
    %v354 = vunpack.c.l.b16 %v94
    %v355 = vunpack.c.l.b16 %v95
    %v356 = vunpack.c.l.b16 %v96
    %v357 = vunpack.c.l.b16 %v97
    %v358 = vunpack.c.l.b16 %v98
    %v359 = vunpack.c.l.b16 %v99
    %v360 = vunpack.c.l.b16 %v100
    %v361 = vunpack.c.l.b16 %v101
    %v362 = vunpack.c.l.b16 %v102
    %v363 = vunpack.c.l.b16 %v103
    %v364 = vunpack.c.l.b16 %v104
    %v365 = vunpack.c.l.b16 %v105
    %v366 = vunpack.c.l.b16 %v106
    %v367 = vunpack.c.l.b16 %v107
    %v368 = vunpack.c.l.b16 %v108
    %v369 = vunpack.c.l.b16 %v109
    %v370 = vunpack.c.l.b16 %v110
    %v371 = vunpack.c.l.b16 %v111
    %v372 = vunpack.c.l.b16 %v112
    %v373 = vunpack.c.l.b16 %v113
    %v374 = vunpack.c.l.b16 %v114
    %v375 = vunpack.c.l.b16 %v115
    %v376 = vunpack.c.l.b16 %v116
    %v377 = vunpack.c.l.b16 %v117
    %v378 = vunpack.c.l.b16 %v118
    %v379 = vunpack.c.l.b16 %v119
    %v380 = vunpack.c.l.b16 %v120
    %v381 = vunpack.c.l.b16 %v121
    %v382 = vunpack.c.l.b16 %v122
    %v383 = vunpack.c.l.b16 %v123
    %v384 = vunpack.c.l.b16 %v124
    %v385 = vunpack.c.l.b16 %v125
    %v386 = vunpack.c.l.b16 %v126
    %v387 = vunpack.c.l.b16 %v127
    %v388 = vunpack.c.l.b16 %v128
    %v389 = vunpack.c.l.b16 %v129
    %v390 = vunpack.c.l.b16 %v130
    %v391 = vunpack.c.l.b16 %v131
    %v392 = vunpack.c.l.b16 %v132
    %v393 = vunpack.c.l.b16 %v133
    %v394 = vunpack.c.l.b16 %v134
    %v395 = vunpack.c.l.b16 %v135
    %v396 = vunpack.c.l.b16 %v136
    %v397 = vunpack.c.l.b16 %v137
    %v398 = vunpack.c.l.b16 %v138
    %v399 = vunpack.c.l.b16 %v139
    %v400 = vunpack.c.l.b16 %v140
    %v401 = vunpack.c.l.b16 %v141
    %v402 = vunpack.c.l.b16 %v142
    %v403 = vunpack.c.l.b16 %v143
    %v404 = vunpack.c.l.b16 %v144
    %v405 = vunpack.c.l.b16 %v145
    %v406 = vunpack.c.l.b16 %v146
    %v407 = vunpack.c.l.b16 %v147
    %v408 = vunpack.c.l.b16 %v148
    %v409 = vunpack.c.l.b16 %v149
    %v410 = vunpack.c.l.b16 %v150
    %v411 = vunpack.c.l.b16 %v151
    %v412 = vunpack.c.l.b16 %v152
    %v413 = vunpack.c.l.b16 %v153
    %v414 = vunpack.c.l.b16 %v154
    %v415 = vunpack.c.l.b16 %v155
    %v416 = vunpack.c.l.b16 %v156
    %v417 = vunpack.c.l.b16 %v157
    %v418 = vunpack.c.l.b16 %v158
    %v419 = vunpack.c.l.b16 %v159
    %v420 = vunpack.c.l.b16 %v160
    %v421 = vunpack.c.l.b16 %v161
    %v422 = vunpack.c.l.b16 %v162
    %v423 = vunpack.c.l.b16 %v163
    %v424 = vunpack.c.l.b16 %v164
    %v425 = vunpack.c.l.b16 %v165
    %v426 = vunpack.c.l.b16 %v166
    %v427 = vunpack.c.l.b16 %v167
    %v428 = vunpack.c.l.b16 %v168
    %v429 = vunpack.c.l.b16 %v169
    %v430 = vunpack.c.l.b16 %v170
    %v431 = vunpack.c.l.b16 %v171
    %v432 = vunpack.c.l.b16 %v172
    %v433 = vunpack.c.l.b16 %v173
    %v434 = vunpack.c.l.b16 %v174
    %v435 = vunpack.c.l.b16 %v175
    %v436 = vunpack.c.l.b16 %v176
    %v437 = vunpack.c.l.b16 %v177
    %v438 = vunpack.c.l.b16 %v178
    %v439 = vunpack.c.l.b16 %v179
    %v440 = vpack.c.b16 %v313, %v312
    %v441 = vpack.c.b16 %v315, %v314
    %v442 = vpack.c.b16 %v317, %v316
    %v443 = vpack.c.b16 %v319, %v318
    %v444 = vpack.c.b16 %v321, %v320
    %v445 = vpack.c.b16 %v323, %v322
    %v446 = vpack.c.b16 %v325, %v324
    %v447 = vpack.c.b16 %v327, %v326
    %v448 = vpack.c.b16 %v329, %v328
    %v449 = vpack.c.b16 %v331, %v330
    %v450 = vpack.c.b16 %v333, %v332
    %v451 = vpack.c.b16 %v335, %v334
    %v452 = vpack.c.b16 %v337, %v336
    %v453 = vpack.c.b16 %v339, %v338
    %v454 = vpack.c.b16 %v341, %v340
    %v455 = vpack.c.b16 %v343, %v342
    %v456 = vpack.c.b16 %v345, %v344
    %v457 = vpack.c.b16 %v347, %v346
    %v458 = vpack.c.b16 %v349, %v348
    %v459 = vpack.c.b16 %v351, %v350
    %v460 = vpack.c.b16 %v353, %v352
    %v461 = vpack.c.b16 %v355, %v354
    %v462 = vpack.c.b16 %v357, %v356
    %v463 = vpack.c.b16 %v359, %v358
    %v464 = vpack.c.b16 %v361, %v360
    %v465 = vpack.c.b16 %v363, %v362
    %v466 = vpack.c.b16 %v365, %v364
    %v467 = vpack.c.b16 %v367, %v366
    %v468 = vpack.c.b16 %v369, %v368
    %v469 = vpack.c.b16 %v371, %v370
    %v470 = vpack.c.b16 %v373, %v372
    %v471 = vpack.c.b16 %v375, %v374
    %v472 = vpack.c.b16 %v377, %v376
    %v473 = vpack.c.b16 %v379, %v378
    %v474 = vpack.c.b16 %v381, %v380
    %v475 = vpack.c.b16 %v383, %v382
    %v476 = vpack.c.b16 %v385, %v384
    %v477 = vpack.c.b16 %v387, %v386
    %v478 = vpack.c.b16 %v389, %v388
    %v479 = vpack.c.b16 %v391, %v390
    %v480 = vpack.c.b16 %v393, %v392
    %v481 = vpack.c.b16 %v395, %v394
    %v482 = vpack.c.b16 %v397, %v396
    %v483 = vpack.c.b16 %v399, %v398
    %v484 = vpack.c.b16 %v401, %v400
    %v485 = vpack.c.b16 %v403, %v402
    %v486 = vpack.c.b16 %v405, %v404
    %v487 = vpack.c.b16 %v407, %v406
    %v488 = vpack.c.b16 %v409, %v408
    %v489 = vpack.c.b16 %v411, %v410
    %v490 = vpack.c.b16 %v413, %v412
    %v491 = vpack.c.b16 %v415, %v414
    %v492 = vpack.c.b16 %v417, %v416
    %v493 = vpack.c.b16 %v419, %v418
    %v494 = vpack.c.b16 %v421, %v420
    %v495 = vpack.c.b16 %v423, %v422
    %v496 = vpack.c.b16 %v425, %v424
    %v497 = vpack.c.b16 %v427, %v426
    %v498 = vpack.c.b16 %v429, %v428
    %v499 = vpack.c.b16 %v431, %v430
    %v500 = vpack.c.b16 %v433, %v432
    %v501 = vpack.c.b16 %v435, %v434
    %v502 = vpack.c.b16 %v437, %v436
    %v503 = vpack.c.b16 %v439, %v438
    %568 = vmatpush.bf16.msra.mxu0 %v447
    %569 = vmatpush.bf16.msra.mxu0 %v446
    %570 = vmatpush.bf16.msra.mxu0 %v445
    %571 = vmatpush.bf16.msra.mxu0 %v444
    %572 = vmatpush.bf16.msra.mxu0 %v443
    %573 = vmatpush.bf16.msra.mxu0 %v442
    %574 = vmatpush.bf16.msra.mxu0 %v441
    %575 = vmatpush.bf16.msra.mxu0 %v440
    %576 = vmatmul.bf16.gmra.mxu0 %v44
    %v577 = vpop.f32.mrf.mxu0
    %v578 = vadd.f32 %v182, %v577
    %v579 = vpop.f32.mrf.mxu0
    %580 = vdwg.mxu0
    %581 = vmatpush.bf16.msra.mxu0 %v455
    %582 = vmatpush.bf16.msra.mxu0 %v454
    %583 = vmatpush.bf16.msra.mxu0 %v453
    %584 = vmatpush.bf16.msra.mxu0 %v452
    %585 = vmatpush.bf16.msra.mxu0 %v451
    %586 = vmatpush.bf16.msra.mxu0 %v450
    %587 = vmatpush.bf16.msra.mxu0 %v449
    %588 = vmatpush.bf16.msra.mxu0 %v448
    %589 = vmatmul.bf16.gmra.mxu0 %v45
    %v590 = vpop.f32.mrf.mxu0
    %v591 = vadd.f32 %v578, %v590
    %v592 = vpop.f32.mrf.mxu0
    %593 = vdwg.mxu0
    %594 = vmatpush.bf16.msra.mxu0 %v463
    %595 = vmatpush.bf16.msra.mxu0 %v462
    %596 = vmatpush.bf16.msra.mxu0 %v461
    %597 = vmatpush.bf16.msra.mxu0 %v460
    %598 = vmatpush.bf16.msra.mxu0 %v459
    %599 = vmatpush.bf16.msra.mxu0 %v458
    %600 = vmatpush.bf16.msra.mxu0 %v457
    %601 = vmatpush.bf16.msra.mxu0 %v456
    %602 = vmatmul.bf16.gmra.mxu0 %v46
    %v603 = vpop.f32.mrf.mxu0
    %v604 = vadd.f32 %v591, %v603
    %v605 = vpop.f32.mrf.mxu0
    %606 = vdwg.mxu0
    %607 = vmatpush.bf16.msra.mxu0 %v471
    %608 = vmatpush.bf16.msra.mxu0 %v470
    %609 = vmatpush.bf16.msra.mxu0 %v469
    %610 = vmatpush.bf16.msra.mxu0 %v468
    %611 = vmatpush.bf16.msra.mxu0 %v467
    %612 = vmatpush.bf16.msra.mxu0 %v466
    %613 = vmatpush.bf16.msra.mxu0 %v465
    %614 = vmatpush.bf16.msra.mxu0 %v464
    %615 = vmatmul.bf16.gmra.mxu0 %v47
    %v616 = vpop.f32.mrf.mxu0
    %v617 = vadd.f32 %v604, %v616
    %v618 = vpop.f32.mrf.mxu0
    %619 = vdwg.mxu0
    %620 = vmatpush.bf16.msra.mxu0 %v479
    %621 = vmatpush.bf16.msra.mxu0 %v478
    %622 = vmatpush.bf16.msra.mxu0 %v477
    %623 = vmatpush.bf16.msra.mxu0 %v476
    %624 = vmatpush.bf16.msra.mxu0 %v475
    %625 = vmatpush.bf16.msra.mxu0 %v474
    %626 = vmatpush.bf16.msra.mxu0 %v473
    %627 = vmatpush.bf16.msra.mxu0 %v472
    %628 = vmatmul.bf16.gmra.mxu0 %v48
    %v629 = vpop.f32.mrf.mxu0
    %v630 = vadd.f32 %v617, %v629
    %v631 = vpop.f32.mrf.mxu0
    %632 = vdwg.mxu0
    %633 = vmatpush.bf16.msra.mxu0 %v487
    %634 = vmatpush.bf16.msra.mxu0 %v486
    %635 = vmatpush.bf16.msra.mxu0 %v485
    %636 = vmatpush.bf16.msra.mxu0 %v484
    %637 = vmatpush.bf16.msra.mxu0 %v483
    %638 = vmatpush.bf16.msra.mxu0 %v482
    %639 = vmatpush.bf16.msra.mxu0 %v481
    %640 = vmatpush.bf16.msra.mxu0 %v480
    %641 = vmatmul.bf16.gmra.mxu0 %v49
    %v642 = vpop.f32.mrf.mxu0
    %v643 = vadd.f32 %v630, %v642
    %v644 = vpop.f32.mrf.mxu0
    %645 = vdwg.mxu0
    %646 = vmatpush.bf16.msra.mxu0 %v495
    %647 = vmatpush.bf16.msra.mxu0 %v494
    %648 = vmatpush.bf16.msra.mxu0 %v493
    %649 = vmatpush.bf16.msra.mxu0 %v492
    %650 = vmatpush.bf16.msra.mxu0 %v491
    %651 = vmatpush.bf16.msra.mxu0 %v490
    %652 = vmatpush.bf16.msra.mxu0 %v489
    %653 = vmatpush.bf16.msra.mxu0 %v488
    %654 = vmatmul.bf16.gmra.mxu0 %v50
    %v655 = vpop.f32.mrf.mxu0
    %v656 = vadd.f32 %v643, %v655
    %v657 = vpop.f32.mrf.mxu0
    %658 = vdwg.mxu0
    %659 = vmatpush.bf16.msra.mxu0 %v503
    %660 = vmatpush.bf16.msra.mxu0 %v502
    %661 = vmatpush.bf16.msra.mxu0 %v501
    %662 = vmatpush.bf16.msra.mxu0 %v500
    %663 = vmatpush.bf16.msra.mxu0 %v499
    %664 = vmatpush.bf16.msra.mxu0 %v498
    %665 = vmatpush.bf16.msra.mxu0 %v497
    %666 = vmatpush.bf16.msra.mxu0 %v496
    %667 = vmatmul.bf16.gmra.mxu0 %v51
    %v668 = vpop.f32.mrf.mxu0
    %v669 = vadd.f32 %v656, %v668
    %v670 = vpop.f32.mrf.mxu0
    %671 = vdwg.mxu0
    %v672 = vmax.f32 %v669, 0.0
    %v673 = vmul.f32 %v672, %v672
    %674 = vadd.xlane.f32.xlu0 %v673
    %v675 = vpop.xlane.xlu0 %674
    %v676 = vmax.f32 %v675, 1e-24
    %v677 = vrsqrt.pop %v676
    %v678 = vmul.f32 %v677, %v676
    %v679 = vmul.f32 %v678, %v677
    %v680 = vmul.f32 0.5, %v679
    %v681 = vsub.f32 1.5, %v680
    %v682 = vmul.f32 %v677, %v681
    %vm683 = vweird.f32 %v676
    %vm684 = vweird.f32 %v677
    %vm685 = vmor %vm683, %vm684
    %v686 = vsel %vm685, %v677, %v682
    %v687 = vmul.f32 %v672, %v686
    %v688 = vpack.c.bf16 %v687, %v687
    %v689 = vld [vmem:[%s3] sm:$0xf]
    %v690 = vld [vmem:[%s3 + $0x4] sm:$0xf]
    %v691 = vld [vmem:[%s3 + $0x8] sm:$0xf]
    %v692 = vld [vmem:[%s3 + $0xc] sm:$0xf]
    %v693 = vld [vmem:[%s3 + $0x10] sm:$0xf]
    %v694 = vld [vmem:[%s3 + $0x14] sm:$0xf]
    %v695 = vld [vmem:[%s3 + $0x18] sm:$0xf]
    %v696 = vld [vmem:[%s3 + $0x1c] sm:$0xf]
    %v697 = vld [vmem:[%s3 + $0x20] sm:$0xf]
    %v698 = vld [vmem:[%s3 + $0x24] sm:$0xf]
    %v699 = vld [vmem:[%s3 + $0x28] sm:$0xf]
    %v700 = vld [vmem:[%s3 + $0x2c] sm:$0xf]
    %v701 = vld [vmem:[%s3 + $0x30] sm:$0xf]
    %v702 = vld [vmem:[%s3 + $0x34] sm:$0xf]
    %v703 = vld [vmem:[%s3 + $0x38] sm:$0xf]
    %v704 = vld [vmem:[%s3 + $0x3c] sm:$0xf]
    %v705 = vld [vmem:[%s4] sm:$0x1]
    %v707 = vperm.slane %v705, 0
    %v725 = vunpack.c.l.b16 %v689
    %v726 = vunpack.c.l.b16 %v690
    %v727 = vunpack.c.l.b16 %v691
    %v728 = vunpack.c.l.b16 %v692
    %v729 = vunpack.c.l.b16 %v693
    %v730 = vunpack.c.l.b16 %v694
    %v731 = vunpack.c.l.b16 %v695
    %v732 = vunpack.c.l.b16 %v696
    %v733 = vunpack.c.l.b16 %v697
    %v734 = vunpack.c.l.b16 %v698
    %v735 = vunpack.c.l.b16 %v699
    %v736 = vunpack.c.l.b16 %v700
    %v737 = vunpack.c.l.b16 %v701
    %v738 = vunpack.c.l.b16 %v702
    %v739 = vunpack.c.l.b16 %v703
    %v740 = vunpack.c.l.b16 %v704
    %v741 = vpack.c.b16 %v726, %v725
    %v742 = vpack.c.b16 %v728, %v727
    %v743 = vpack.c.b16 %v730, %v729
    %v744 = vpack.c.b16 %v732, %v731
    %v745 = vpack.c.b16 %v734, %v733
    %v746 = vpack.c.b16 %v736, %v735
    %v747 = vpack.c.b16 %v738, %v737
    %v748 = vpack.c.b16 %v740, %v739
    %757 = vmatpush.bf16.msra.mxu0 %v748
    %758 = vmatpush.bf16.msra.mxu0 %v747
    %759 = vmatpush.bf16.msra.mxu0 %v746
    %760 = vmatpush.bf16.msra.mxu0 %v745
    %761 = vmatpush.bf16.msra.mxu0 %v744
    %762 = vmatpush.bf16.msra.mxu0 %v743
    %763 = vmatpush.bf16.msra.mxu0 %v742
    %764 = vmatpush.bf16.msra.mxu0 %v741
    %765 = vmatmul.bf16.gmra.mxu0 %v688
    %v766 = vpop.f32.mrf.mxu0
    %v767 = vadd.f32 %v707, %v766
    %v768 = vpop.f32.mrf.mxu0
    %769 = vdwg.mxu0
    %770 = vst [vmem:[%s5] sm:$0xff] %v767
    // Predicated region
    $region26: #{a_call__.1} parent=1 // pred_check
      _
    $region27: #{a_call__.1} parent=1 // pred_check_branch
      %772 = sbr.rel (0) target = $region29
    $region28: #{a_call__.1} parent=1 // pred_region
      _
    $region29: #{a_call__.1} parent=1 // pred_fallthru
      _
    // Predicated region
    $region30: #{a_call__.1} parent=1 // pred_check
      _
    $region31: #{a_call__.1} parent=1 // pred_check_branch
      %774 = sbr.rel (0) target = $region33
    $region32: #{a_call__.1} parent=1 // pred_region
      _
    $region33: #{a_call__.1} parent=1 // pred_fallthru
      _
    %775 = vsyncpa [#allocation3], 1

</llo_original>
